<compile_context>
chip_gen: v5e
topology: v5e:2x2
jax: 0.10.0
libtpu: 0.0.40
codegen_flags: <defaults>
</compile_context>

<pallas_src>
import functools

import jax
import jax.numpy as jnp
from jax.experimental import pallas as pl
from jax.experimental.pallas import tpu as pltpu

_LANES = 1024          # lane-dense last dim (multiple of 128)
_MAX_BLOCK_ROWS = 512  # 512 * 1024 * 4 B = 2 MiB per f32 block


def _scale_kernel(scale_ref, g_ref, o_ref):
    # scale_ref: (1, 1) f32 in SMEM; g_ref/o_ref: (block_rows, _LANES) tiles in VMEM.
    scale = scale_ref[0, 0]
    g = g_ref[...]
    # Multiply in f32, cast back to the grad dtype (no-op cast for f32 grads).
    o_ref[...] = (g.astype(jnp.float32) * scale).astype(o_ref.dtype)


def _scaled_grad(g, scale_factor):
    """Return g * scale_factor via a tiled, lane-dense Pallas kernel."""
    orig_shape = g.shape
    orig_dtype = g.dtype
    total = g.size

    # Rows needed for a (rows, _LANES) slab.
    rows = -(-total // _LANES)  # cdiv
    if rows <= _MAX_BLOCK_ROWS:
        block_rows = rows                     # full-dim block (always legal)
    else:
        block_rows = _MAX_BLOCK_ROWS          # multiple of 8
        rows = -(-rows // block_rows) * block_rows  # round rows up to block multiple

    padded_total = rows * _LANES
    flat = g.reshape(-1)
    if padded_total != total:
        flat = jnp.pad(flat, (0, padded_total - total))
    slab = flat.reshape(rows, _LANES)

    scale_arr = jnp.full((1, 1), scale_factor, dtype=jnp.float32)

    out = pl.pallas_call(
        _scale_kernel,
        out_shape=jax.ShapeDtypeStruct((rows, _LANES), orig_dtype),
        grid=(rows // block_rows,),
        in_specs=[
            pl.BlockSpec(memory_space=pltpu.MemorySpace.SMEM),      # scale scalar
            pl.BlockSpec((block_rows, _LANES), lambda i: (i, 0)),   # grad tile
        ],
        out_specs=pl.BlockSpec((block_rows, _LANES), lambda i: (i, 0)),
        compiler_params=pltpu.CompilerParams(
            dimension_semantics=("parallel",),  # shard grid across TCs (v7x)
        ),
    )(scale_arr, slab)

    out_flat = out.reshape(-1)
    if padded_total != total:
        out_flat = out_flat[:total]
    return out_flat.reshape(orig_shape)


@functools.partial(jax.custom_vjp, nondiff_argnums=(1,))
def grad_scaler(x, scale_factor):
    # Forward: identity. No Pallas call, no copy -- zero cost.
    return x


def _grad_scaler_fwd(x, scale_factor):
    return x, None


def _grad_scaler_bwd(scale_factor, _residuals, g):
    return (_scaled_grad(g, scale_factor),)


grad_scaler.defvjp(_grad_scaler_fwd, _grad_scaler_bwd)


class GradScaler:
    """Identity on forward, grad * scale_factor on backward."""

    def __init__(self, scale_factor: float):
        self.scale_factor = float(scale_factor)

    def __call__(self, x):
        return grad_scaler(x, self.scale_factor)


if __name__ == "__main__":
    key = jax.random.PRNGKey(0)
    kx, kg = jax.random.split(key)

    x = jax.random.normal(kx, (2, 4, 16, 16), dtype=jnp.float32)
    scale = 2.5
    scaler = GradScaler(scale)

    # Forward: identity.
    y, vjp_fn = jax.vjp(scaler, x)

    # Backward: grad * scale (runs the Pallas kernel).
    g = jax.random.normal(kg, x.shape, dtype=jnp.float32)
    (dx,) = vjp_fn(g)
    dx = jax.block_until_ready(dx)
    y = jax.block_until_ready(y)

    assert jnp.allclose(y, x), "forward must be identity"
    assert jnp.allclose(dx, g * scale, rtol=1e-6, atol=1e-6), "backward must scale grads"

    print("KERNEL_OK")
</pallas_src>

<mosaic_0001>
module attributes {stable_mosaic.version = 11 : i64} {
  func.func @_scale_kernel(%arg0: i32, %arg1: memref<1x1xf32, #tpu.memory_space<smem>>, %arg2: memref<2x1024xf32, #tpu.memory_space<vmem>>, %arg3: memref<2x1024xf32, #tpu.memory_space<vmem>>) attributes {dimension_semantics = [#tpu.dimension_semantics<parallel>], iteration_bounds = array<i64: 1>, scalar_prefetch = 0 : i64, scratch_operands = 0 : i64, tpu.core_type = #tpu.core_type<tc>, window_params = [{transform_indices = @transform_0, window_bounds = array<i64: 1, 1>}, {transform_indices = @transform_1, window_bounds = array<i64: 2, 1024>}, {transform_indices = @transform_2, window_bounds = array<i64: 2, 1024>}]} {
    %c0 = arith.constant 0 : index
    %c0_0 = arith.constant 0 : index
    %0 = memref.load %arg1[%c0, %c0_0] : memref<1x1xf32, #tpu.memory_space<smem>>
    %c0_1 = arith.constant 0 : index
    %c0_2 = arith.constant 0 : index
    %1 = vector.load %arg2[%c0_1, %c0_2] : memref<2x1024xf32, #tpu.memory_space<vmem>>, vector<2x1024xf32>
    %2 = vector.broadcast %0 : f32 to vector<2x1024xf32>
    %3 = arith.mulf %1, %2 : vector<2x1024xf32>
    %c0_3 = arith.constant 0 : index
    %c0_4 = arith.constant 0 : index
    %4 = vector.load %arg3[%c0_3, %c0_4] : memref<2x1024xf32, #tpu.memory_space<vmem>>, vector<2x1024xf32>
    tpu.vector_store %arg3[%c0_3, %c0_4], %3 {strides = array<i32>} : memref<2x1024xf32, #tpu.memory_space<vmem>>, vector<2x1024xf32>,
    return
  }
  func.func @transform_0(%arg0: i32) -> (i32, i32) {
    %c0_i32 = arith.constant 0 : i32
    %c0_i32_0 = arith.constant 0 : i32
    %c0_i32_1 = arith.constant 0 : i32
    return %c0_i32, %c0_i32_0 : i32, i32
  }
  func.func @transform_1(%arg0: i32) -> (i32, i32) {
    %c0_i32 = arith.constant 0 : i32
    %c0_i32_0 = arith.constant 0 : i32
    return %arg0, %c0_i32 : i32, i32
  }
  func.func @transform_2(%arg0: i32) -> (i32, i32) {
    %c0_i32 = arith.constant 0 : i32
    %c0_i32_0 = arith.constant 0 : i32
    return %arg0, %c0_i32 : i32, i32
  }
}

</mosaic_0001>

<llo_original>
// kernel: tpu_custom_call.1
$region0: #{tpu_custom_call.1}
  #allocation0 [shape = 'u32[]', space=smem, size = 0x4, offset = 0x4, fixed_abs, tag = 'smem constant byte address 0x4 - core index']
  #allocation1 [shape = 'u32[72,128]{1,0:T(1,128)}', space=vmem, size = 0x9000, scoped, tag = 'internal scratch']
  #allocation2 [shape = 'f32[1,1]{1,0:T(1,128)S(6)}', space=smem, size = 0x200, scoped, tag = 'scoped memory for tpu_custom_call.1']
  %s0 = inlined_call_operand.<no memory space> [shape: f32[1,1], index: 0, kind: input, shape index: {}]
  %s1 = inlined_call_operand.hbm [shape: f32[2,1024], index: 1, kind: input, shape index: {}]
  %s2 = inlined_call_operand.hbm [shape: f32[2,1024], index: 2, kind: output, shape index: {}]
  %s3 = sld [smem:[#allocation0]]
  $region22: #{tpu_custom_call.1} parent=0
    _
  %s5 = ssub.s32 1, %s3
  %s6 = scalar_select 0, %s5, %s3
  %7 = sst [smem:[#allocation2]] %s0
  $region1: #{tpu_custom_call.1} parent=0
    #allocation3 [shape = 'u8[8192]{0}', space=vmem, size = 0x2000, scoped, tag = 'input window, operand 1, single buffered']
    #allocation4 [shape = 's32[1]{0}', space=sflag, size = 0x4, scoped, tag = 'scoped memory for tpu_custom_call.1']
    #allocation5 [shape = 's32[1]{0}', space=sflag, size = 0x4, scoped, tag = 'scoped memory for tpu_custom_call.1']
    #allocation6 [shape = 'u8[8192]{0}', space=vmem, size = 0x2000, scoped, tag = 'output window, operand 0, single buffered']
    %8 = vsyncpa [#allocation4], 0
    %9 = vsyncpa [#allocation5], 0
    // Predicated region
    $region2: #{tpu_custom_call.1} parent=1 // pred_check
      _
    $region3: #{tpu_custom_call.1} parent=1 // pred_check_branch
      %11 = sbr.rel (0) target = $region5
    $region4: #{tpu_custom_call.1} parent=1 // pred_region
      _
    $region5: #{tpu_custom_call.1} parent=1 // pred_fallthru
      _
    // Predicated region
    $region6: #{tpu_custom_call.1} parent=1 // pred_check
      _
    $region7: #{tpu_custom_call.1} parent=1 // pred_check_branch
      %13 = sbr.rel (0) target = $region9
    $region8: #{tpu_custom_call.1} parent=1 // pred_region
      %15 = vsyncadd [#allocation4], 0
      %s17 = sshll.u32 %s1, 4
      %s18 = int_to_ptr.hbm [resolvable:$true] %s17
      %s19 = sshll.u32 [#allocation3], 4
      %s20 = int_to_ptr.vmem [resolvable:$true] %s19
      %22 = dma.hbm_to_vmem [thread:$0]  %s18, 256, %s20, [#allocation4]
    $region9: #{tpu_custom_call.1} parent=1 // pred_fallthru
      _
    // Predicated region
    $region10: #{tpu_custom_call.1} parent=1 // pred_check
      _
    $region11: #{tpu_custom_call.1} parent=1 // pred_check_branch
      %24 = sbr.rel (0) target = $region13
    $region12: #{tpu_custom_call.1} parent=1 // pred_region
      %26 = dma.done [#allocation4], 256
    $region13: #{tpu_custom_call.1} parent=1 // pred_fallthru
      _
    %s27 = sld [smem:[#allocation2]]
    %v28 = vld [vmem:[#allocation3] sm:$0xff]
    %v29 = vld [vmem:[#allocation3 + $0x8] sm:$0xff]
    %v30 = vstv %s27
    %v31 = vmul.f32 %v28, %v30
    %v32 = vmul.f32 %v29, %v30
    %33 = vst [vmem:[#allocation6] sm:$0xff] %v31
    %34 = vst [vmem:[#allocation6 + $0x8] sm:$0xff] %v32
    // Predicated region
    $region14: #{tpu_custom_call.1} parent=1 // pred_check
      _
    $region15: #{tpu_custom_call.1} parent=1 // pred_check_branch
      %36 = sbr.rel (0) target = $region17
    $region16: #{tpu_custom_call.1} parent=1 // pred_region
      %38 = vsyncadd [#allocation5], 0
      %s40 = sshll.u32 [#allocation6], 4
      %s41 = int_to_ptr.vmem [resolvable:$true] %s40
      %s42 = sshll.u32 %s2, 4
      %s43 = int_to_ptr.hbm [resolvable:$true] %s42
      %45 = dma.vmem_to_hbm [thread:$0]  %s41, 256, %s43, [#allocation5]
    $region17: #{tpu_custom_call.1} parent=1 // pred_fallthru
      _
    // Predicated region
    $region18: #{tpu_custom_call.1} parent=1 // pred_check
      _
    $region19: #{tpu_custom_call.1} parent=1 // pred_check_branch
      %47 = sbr.rel (0) target = $region21
    $region20: #{tpu_custom_call.1} parent=1 // pred_region
      %49 = dma.done [#allocation5], 256
    $region21: #{tpu_custom_call.1} parent=1 // pred_fallthru
      _
    %50 = vsyncpa [#allocation4], 1
    %51 = vsyncpa [#allocation5], 1

</llo_original>
